<compile_context>
chip_gen: v7x
topology: tpu7x:2x2x1
jax: 0.10.0
libtpu: 0.0.40
codegen_flags: <defaults>
</compile_context>

<pallas_src>
import jax
import jax.numpy as jnp
from jax.experimental import pallas as pl
from jax.experimental.pallas import tpu as pltpu

HIDDEN = 100     # true hidden width of ActorNet.fc
H_PAD = 128      # padded hidden width (one full lane dim; lane 127 = bias lane)


def _round_up(x, m):
    return ((x + m - 1) // m) * m


def _choose_tile(batch, block_b):
    """Batch tile: multiple of 8, <= block_b, >=2 grid steps for big batches
    (v7x megacore), minimal row padding."""
    b8 = _round_up(batch, 8)
    if b8 <= 256:
        return b8                                   # single step: latency regime
    n_steps = max(2, pl.cdiv(b8, block_b))
    return min(block_b, _round_up(pl.cdiv(b8, n_steps), 8))


def actor_kernel(s_ref, w1_ref, b1_ref, w2t_ref, u_ref):
    s = s_ref[...]          # (TB, n_states)   n_states is tiny (3)
    w1 = w1_ref[...]        # (n_states, H_PAD)

    # ----- Layer 1: Linear(n_states, 100) + ReLU as VPU broadcast-FMAs -----
    # K = n_states (= 3) is far too small to be worth an MXU push/pop; three
    # broadcast multiply-adds on (TB, 128) vregs run in otherwise-idle VALU
    # slots. The Python loop is static (unrolled at trace time).
    h = b1_ref[...] + s[:, 0:1] * w1[0:1, :]
    for i in range(1, s.shape[1]):
        h = h + s[:, i:i + 1] * w1[i:i + 1, :]
    h = jnp.maximum(h, 0.0)                     # ReLU on the VPU.
    # Padded lane 127 holds relu(1.0) == 1.0 -> constant-1 column carrying the
    # folded mu_head bias through the contraction below.

    # ----- Layer 2: Linear(100, n_actions), bias folded into w2t column 127 -----
    # n_actions is tiny, so per action column: VPU multiply + XLU lane-reduce.
    # No MXU drain, and tanh (EUP) runs only on the real action lanes.
    n_act = u_ref.shape[-1]
    for a in range(n_act):                      # static unroll
        ua = jnp.sum(h * w2t_ref[a:a + 1, :], axis=-1, keepdims=True)  # (TB,1)
        u_ref[:, a:a + 1] = 2.0 * jnp.tanh(ua)


def pad_params(w1, b1, w2, b2):
    """Pad params to lane-aligned shapes and fold b2 into transposed W2.

    w1: (n_states, HIDDEN)  b1: (1, HIDDEN)
    w2: (HIDDEN, n_actions) b2: (1, n_actions)

    Returns:
      w1p:  (n_states, H_PAD)
      b1p:  (1, H_PAD)        with lane 127 = 1.0 (constant bias-carrier lane)
      w2tp: (n_actions, H_PAD) = W2.T padded, column 127 = b2
    """
    S, H = w1.shape
    _, A = w2.shape
    assert H < H_PAD, "need a spare padded hidden lane for the bias fold"

    w1p = jnp.zeros((S, H_PAD), jnp.float32).at[:, :H].set(w1)
    b1p = jnp.zeros((1, H_PAD), jnp.float32).at[0, :H].set(b1.reshape(-1))
    b1p = b1p.at[0, H_PAD - 1].set(1.0)                  # constant-1 lane
    w2tp = jnp.zeros((A, H_PAD), jnp.float32).at[:, :H].set(w2.T)
    w2tp = w2tp.at[:, H_PAD - 1].set(b2.reshape(-1))     # b2 folded into col 127
    return w1p, b1p, w2tp


def actor_forward(s, w1p, b1p, w2tp, *, block_b=512, input_dtype=None):
    """s: (B, n_states) f32. Padded params from pad_params. Returns (B, n_actions).

    input_dtype=jnp.bfloat16 halves the activation HBM stream on v6e/v7x
    (leave as None/f32 on v5e); accumulation stays f32 inside the kernel.
    """
    B, S = s.shape
    n_actions = w2tp.shape[0]
    if input_dtype is not None and s.dtype != input_dtype:
        s = s.astype(input_dtype)

    TB = _choose_tile(B, block_b)
    Bp = _round_up(B, TB)
    if Bp != B:
        s = jnp.pad(s, ((0, Bp - B), (0, 0)))
    grid = (Bp // TB,)

    flops = 2 * Bp * S * H_PAD + 2 * Bp * H_PAD * n_actions
    bytes_accessed = (s.size * s.dtype.itemsize
                      + (w1p.size + b1p.size + w2tp.size) * 4
                      + Bp * n_actions * 4)

    out = pl.pallas_call(
        actor_kernel,
        out_shape=jax.ShapeDtypeStruct((Bp, n_actions), jnp.float32),
        grid_spec=pltpu.PrefetchScalarGridSpec(
            num_scalar_prefetch=0,
            grid=grid,
            in_specs=[
                pl.BlockSpec((TB, S), lambda i: (i, 0)),          # activations stream
                pl.BlockSpec((S, H_PAD), lambda i: (0, 0)),        # weights stay
                pl.BlockSpec((1, H_PAD), lambda i: (0, 0)),        #   VMEM-resident
                pl.BlockSpec((n_actions, H_PAD), lambda i: (0, 0)),#   across grid steps
            ],
            out_specs=pl.BlockSpec((TB, n_actions), lambda i: (i, 0)),
        ),
        compiler_params=pltpu.CompilerParams(
            dimension_semantics=("parallel",)),   # batch axis -> 2 TCs on v7x
        cost_estimate=pl.CostEstimate(
            flops=flops,
            transcendentals=Bp * n_actions,
            bytes_accessed=bytes_accessed),
    )(s, w1p, b1p, w2tp)

    return out[:B] if Bp != B else out


def init_params(key, n_states, n_actions, hidden=HIDDEN):
    """Deterministic synthetic init (mimics nn.Linear's U(-1/sqrt(fan_in), ...))."""
    k1, k2, k3, k4 = jax.random.split(key, 4)
    lim1 = 1.0 / jnp.sqrt(jnp.float32(n_states))
    lim2 = 1.0 / jnp.sqrt(jnp.float32(hidden))
    # Stored directly in (in, out) layout (PyTorch stores (out, in); this is W.T).
    w1 = jax.random.uniform(k1, (n_states, hidden), jnp.float32, -lim1, lim1)
    b1 = jax.random.uniform(k2, (1, hidden), jnp.float32, -lim1, lim1)
    w2 = jax.random.uniform(k3, (hidden, n_actions), jnp.float32, -lim2, lim2)
    b2 = jax.random.uniform(k4, (1, n_actions), jnp.float32, -lim2, lim2)
    return w1, b1, w2, b2


if __name__ == "__main__":
    # Pendulum-v1: observation dim 3, action dim 1.
    n_states, n_actions = 3, 1

    key = jax.random.PRNGKey(0)
    k_s, k_p, k_s2 = jax.random.split(key, 3)
    w1, b1, w2, b2 = init_params(k_p, n_states, n_actions)
    w1p, b1p, w2tp = pad_params(w1, b1, w2, b2)

    def ref_fwd(x):
        return 2.0 * jnp.tanh(jnp.maximum(x @ w1 + b1, 0.0) @ w2 + b2)

    # Small batch (single grid step, per-env-step regime).
    s = jax.random.normal(k_s, (8, n_states), jnp.float32)
    u = jax.block_until_ready(actor_forward(s, w1p, b1p, w2tp))
    assert u.shape == (8, n_actions)
    assert jnp.allclose(u, ref_fwd(s), atol=1e-5, rtol=1e-5)

    # Non-multiple batch (exercises tile choice, 2-step grid, row padding).
    s2 = jax.random.normal(k_s2, (300, n_states), jnp.float32)
    u2 = jax.block_until_ready(actor_forward(s2, w1p, b1p, w2tp))
    assert u2.shape == (300, n_actions)
    assert jnp.allclose(u2, ref_fwd(s2), atol=1e-5, rtol=1e-5)

    print("KERNEL_OK")
</pallas_src>

<mosaic_0001>
module attributes {stable_mosaic.version = 11 : i64} {
  func.func @actor_kernel(%arg0: i32, %arg1: memref<8x3xf32, #tpu.memory_space<vmem>>, %arg2: memref<3x128xf32, #tpu.memory_space<vmem>>, %arg3: memref<1x128xf32, #tpu.memory_space<vmem>>, %arg4: memref<1x128xf32, #tpu.memory_space<vmem>>, %arg5: memref<8x1xf32, #tpu.memory_space<vmem>>) attributes {dimension_semantics = [#tpu.dimension_semantics<parallel>], iteration_bounds = array<i64: 1>, scalar_prefetch = 0 : i64, scratch_operands = 0 : i64, tpu.core_type = #tpu.core_type<tc>, window_params = [{transform_indices = @transform_0, window_bounds = array<i64: 8, 3>}, {pipeline_mode = #tpu.pipeline_mode<synchronous>, transform_indices = @transform_1, window_bounds = array<i64: 3, 128>}, {pipeline_mode = #tpu.pipeline_mode<synchronous>, transform_indices = @transform_2, window_bounds = array<i64: 1, 128>}, {pipeline_mode = #tpu.pipeline_mode<synchronous>, transform_indices = @transform_3, window_bounds = array<i64: 1, 128>}, {transform_indices = @transform_4, window_bounds = array<i64: 8, 1>}]} {
    %c0 = arith.constant 0 : index
    %c0_0 = arith.constant 0 : index
    %0 = vector.load %arg1[%c0, %c0_0] : memref<8x3xf32, #tpu.memory_space<vmem>>, vector<8x3xf32>
    %c0_1 = arith.constant 0 : index
    %c0_2 = arith.constant 0 : index
    %1 = vector.load %arg2[%c0_1, %c0_2] : memref<3x128xf32, #tpu.memory_space<vmem>>, vector<3x128xf32>
    %c0_3 = arith.constant 0 : index
    %c0_4 = arith.constant 0 : index
    %2 = vector.load %arg3[%c0_3, %c0_4] : memref<1x128xf32, #tpu.memory_space<vmem>>, vector<1x128xf32>
    %3 = vector.extract_strided_slice %0 {offsets = [0, 0], sizes = [8, 1], strides = [1, 1]} : vector<8x3xf32> to vector<8x1xf32>
    %4 = vector.extract_strided_slice %1 {offsets = [0, 0], sizes = [1, 128], strides = [1, 1]} : vector<3x128xf32> to vector<1x128xf32>
    %5 = vector.broadcast %3 : vector<8x1xf32> to vector<8x128xf32>
    %6 = vector.broadcast %4 : vector<1x128xf32> to vector<8x128xf32>
    %7 = arith.mulf %5, %6 : vector<8x128xf32>
    %8 = vector.broadcast %2 : vector<1x128xf32> to vector<8x128xf32>
    %9 = arith.addf %8, %7 : vector<8x128xf32>
    %10 = vector.extract_strided_slice %0 {offsets = [0, 1], sizes = [8, 1], strides = [1, 1]} : vector<8x3xf32> to vector<8x1xf32>
    %11 = vector.extract_strided_slice %1 {offsets = [1, 0], sizes = [1, 128], strides = [1, 1]} : vector<3x128xf32> to vector<1x128xf32>
    %12 = vector.broadcast %10 : vector<8x1xf32> to vector<8x128xf32>
    %13 = vector.broadcast %11 : vector<1x128xf32> to vector<8x128xf32>
    %14 = arith.mulf %12, %13 : vector<8x128xf32>
    %15 = arith.addf %9, %14 : vector<8x128xf32>
    %16 = vector.extract_strided_slice %0 {offsets = [0, 2], sizes = [8, 1], strides = [1, 1]} : vector<8x3xf32> to vector<8x1xf32>
    %17 = vector.extract_strided_slice %1 {offsets = [2, 0], sizes = [1, 128], strides = [1, 1]} : vector<3x128xf32> to vector<1x128xf32>
    %18 = vector.broadcast %16 : vector<8x1xf32> to vector<8x128xf32>
    %19 = vector.broadcast %17 : vector<1x128xf32> to vector<8x128xf32>
    %20 = arith.mulf %18, %19 : vector<8x128xf32>
    %21 = arith.addf %15, %20 : vector<8x128xf32>
    %cst = arith.constant 0.000000e+00 : f32
    %22 = vector.broadcast %cst : f32 to vector<8x128xf32>
    %23 = arith.maximumf %21, %22 : vector<8x128xf32>
    %c0_5 = arith.constant 0 : index
    %c0_6 = arith.constant 0 : index
    %24 = vector.load %arg4[%c0_5, %c0_6] : memref<1x128xf32, #tpu.memory_space<vmem>>, vector<1x128xf32>
    %25 = vector.broadcast %24 : vector<1x128xf32> to vector<8x128xf32>
    %26 = arith.mulf %23, %25 : vector<8x128xf32>
    %cst_7 = arith.constant dense<0.000000e+00> : vector<8xf32>
    %27 = vector.multi_reduction <add>, %26, %cst_7 [1] : vector<8x128xf32> to vector<8xf32>
    %28 = vector.shape_cast %27 : vector<8xf32> to vector<8x1xf32>
    %29 = math.tanh %28 : vector<8x1xf32>
    %cst_8 = arith.constant 2.000000e+00 : f32
    %30 = vector.broadcast %cst_8 : f32 to vector<8x1xf32>
    %31 = arith.mulf %30, %29 : vector<8x1xf32>
    %c0_9 = arith.constant 0 : index
    %c0_10 = arith.constant 0 : index
    %32 = vector.load %arg5[%c0_9, %c0_10] : memref<8x1xf32, #tpu.memory_space<vmem>>, vector<8x1xf32>
    tpu.vector_store %arg5[%c0_9, %c0_10], %31 {strides = array<i32>} : memref<8x1xf32, #tpu.memory_space<vmem>>, vector<8x1xf32>,
    return
  }
  func.func @transform_0(%arg0: i32) -> (i32, i32) {
    %c0_i32 = arith.constant 0 : i32
    %c0_i32_0 = arith.constant 0 : i32
    return %arg0, %c0_i32 : i32, i32
  }
  func.func @transform_1(%arg0: i32) -> (i32, i32) {
    %c0_i32 = arith.constant 0 : i32
    %c0_i32_0 = arith.constant 0 : i32
    %c0_i32_1 = arith.constant 0 : i32
    return %c0_i32, %c0_i32_0 : i32, i32
  }
  func.func @transform_2(%arg0: i32) -> (i32, i32) {
    %c0_i32 = arith.constant 0 : i32
    %c0_i32_0 = arith.constant 0 : i32
    %c0_i32_1 = arith.constant 0 : i32
    return %c0_i32, %c0_i32_0 : i32, i32
  }
  func.func @transform_3(%arg0: i32) -> (i32, i32) {
    %c0_i32 = arith.constant 0 : i32
    %c0_i32_0 = arith.constant 0 : i32
    %c0_i32_1 = arith.constant 0 : i32
    return %c0_i32, %c0_i32_0 : i32, i32
  }
  func.func @transform_4(%arg0: i32) -> (i32, i32) {
    %c0_i32 = arith.constant 0 : i32
    %c0_i32_0 = arith.constant 0 : i32
    return %arg0, %c0_i32 : i32, i32
  }
}

</mosaic_0001>

<llo_original>
// kernel: tpu_custom_call.1
$region0: #{tpu_custom_call.1}
  #allocation0 [shape = 'u32[]', space=smem, size = 0x4, offset = 0x4, fixed_abs, tag = 'smem constant byte address 0x4 - core index']
  #allocation1 [shape = 'u32[144,128]{1,0:T(1,128)}', space=vmem, size = 0x12000, scoped, tag = 'internal scratch']
  %s0 = inlined_call_operand.vmem [shape: f32[8,3], index: 0, kind: input, shape index: {}]
  %s1 = inlined_call_operand.vmem [shape: f32[3,128], index: 1, kind: input, shape index: {}]
  %s2 = inlined_call_operand.vmem [shape: f32[1,128], index: 2, kind: input, shape index: {}]
  %s3 = inlined_call_operand.vmem [shape: f32[1,128], index: 3, kind: input, shape index: {}]
  %s4 = inlined_call_operand.vmem [shape: f32[8,1], index: 4, kind: output, shape index: {}]
  %s5 = sld [smem:[#allocation0]]
  $region26: #{tpu_custom_call.1} parent=0
    _
  %s7 = ssub.s32 1, %s5
  %s8 = scalar_select 0, %s7, %s5
  // Predicated region
  $region2: #{tpu_custom_call.1} parent=0 // pred_check
    _
  $region3: #{tpu_custom_call.1} parent=0 // pred_check_branch
    %10 = sbr.rel (0) target = $region5
  $region4: #{tpu_custom_call.1} parent=0 // pred_region
    _
  $region5: #{tpu_custom_call.1} parent=0 // pred_fallthru
    _
  // Predicated region
  $region6: #{tpu_custom_call.1} parent=0 // pred_check
    _
  $region7: #{tpu_custom_call.1} parent=0 // pred_check_branch
    %12 = sbr.rel (0) target = $region9
  $region8: #{tpu_custom_call.1} parent=0 // pred_region
    _
  $region9: #{tpu_custom_call.1} parent=0 // pred_fallthru
    _
  // Predicated region
  $region10: #{tpu_custom_call.1} parent=0 // pred_check
    _
  $region11: #{tpu_custom_call.1} parent=0 // pred_check_branch
    %14 = sbr.rel (0) target = $region13
  $region12: #{tpu_custom_call.1} parent=0 // pred_region
    _
  $region13: #{tpu_custom_call.1} parent=0 // pred_fallthru
    _
  // Predicated region
  $region14: #{tpu_custom_call.1} parent=0 // pred_check
    _
  $region15: #{tpu_custom_call.1} parent=0 // pred_check_branch
    %16 = sbr.rel (0) target = $region17
  $region16: #{tpu_custom_call.1} parent=0 // pred_region
    _
  $region17: #{tpu_custom_call.1} parent=0 // pred_fallthru
    _
  %v17 = vld [vmem:[%s0] sm:$0xff]
  %v18 = vld [vmem:[%s1] sm:$0x7]
  %v19 = vld [vmem:[%s2] sm:$0x1]
  %21 = vset.pattern.permute.xlu0 0
  %22 = vperm.xlu0 %21, %v17
  %v23 = vpop.permute.xlu0 %22
  %v25 = vlaneseq
  %v26 = vshrl.u32 %v25, 7
  %v27 = vsub.s32 0, %v26
  %v28 = vrot.slane %v18, %v27
  %v29 = vmul.f32 %v23, %v28
  %v31 = vlaneseq
  %v32 = vshrl.u32 %v31, 7
  %v33 = vsub.s32 0, %v32
  %v34 = vrot.slane %v19, %v33
  %v36 = vadd.f32 %v34, %v29
  %37 = vset.pattern.permute.xlu0 1
  %38 = vperm.xlu0 %37, %v17
  %v39 = vpop.permute.xlu0 %38
  %v41 = vlaneseq
  %v42 = vshrl.u32 %v41, 7
  %v43 = vsub.s32 1, %v42
  %v44 = vrot.slane %v18, %v43
  %v45 = vmul.f32 %v39, %v44
  %v46 = vadd.f32 %v36, %v45
  %47 = vset.pattern.permute.xlu0 2
  %48 = vperm.xlu0 %47, %v17
  %v49 = vpop.permute.xlu0 %48
  %v51 = vlaneseq
  %v52 = vshrl.u32 %v51, 7
  %v53 = vsub.s32 2, %v52
  %v54 = vrot.slane %v18, %v53
  %v55 = vmul.f32 %v49, %v54
  %v56 = vadd.f32 %v46, %v55
  %v57 = vmax.f32 %v56, 0.0
  %v58 = vld [vmem:[%s3] sm:$0x1]
  %v60 = vlaneseq
  %v61 = vshrl.u32 %v60, 7
  %v62 = vsub.s32 0, %v61
  %v63 = vrot.slane %v58, %v62
  %v65 = vmul.f32 %v57, %v63
  %66 = vadd.xlane.f32.xlu0 %v65
  %v67 = vpop.xlane.xlu0 %66
  %v68 = vtanh.pop %v67
  %v69 = vmul.f32 %v68, 2.0
  %vm70 = vcmask 7168
  %71 = vst.msk [vmem:[%s4] sm:$0xff] %vm70, %v69
  // Predicated region
  $region18: #{tpu_custom_call.1} parent=0 // pred_check
    _
  $region19: #{tpu_custom_call.1} parent=0 // pred_check_branch
    %73 = sbr.rel (0) target = $region21
  $region20: #{tpu_custom_call.1} parent=0 // pred_region
    _
  $region21: #{tpu_custom_call.1} parent=0 // pred_fallthru
    _
  // Predicated region
  $region22: #{tpu_custom_call.1} parent=0 // pred_check
    _
  $region23: #{tpu_custom_call.1} parent=0 // pred_check_branch
    %75 = sbr.rel (0) target = $region25
  $region24: #{tpu_custom_call.1} parent=0 // pred_region
    _
  $region25: #{tpu_custom_call.1} parent=0 // pred_fallthru
    _

</llo_original>
